<compile_context>
chip_gen: v5e
topology: v5e:2x2
jax: 0.10.0
libtpu: 0.0.40
codegen_flags: <defaults>
</compile_context>

<pallas_src>
import jax
import jax.numpy as jnp
from jax.experimental import pallas as pl
from jax.experimental.pallas import tpu as pltpu


# Packed resident parameter slab (f32, shape (32, PACK_COLS)):
#   cols 0:16 -> W2            (32, 16)  layer-2 weight
#   col  16   -> w1 rows 0:16  (16,)     layer-1 weight (column)
#   col  17   -> b1 rows 0:16  (16,)     layer-1 bias
#   col  18   -> b2            (32,)     layer-2 bias
#   col  19   -> w3            (32,)     layer-3 weight (column)
#   col  20   -> b3 row 0      ()        layer-3 bias
_W2_LO, _W2_HI = 0, 16
_W1_COL, _B1_COL, _B2_COL, _W3_COL, _B3_COL = 16, 17, 18, 19, 20
PACK_COLS = 21


def reward_mlp_kernel(x_ref, w_ref, o_ref):
    x = x_ref[...]                                    # (1, TB) f32, batch on lanes
    w = w_ref[...]                                    # (32, PACK_COLS), resident

    w2 = w[:, _W2_LO:_W2_HI]                          # (32, 16)
    w1 = w[0:16, _W1_COL:_W1_COL + 1]                 # (16, 1)
    b1 = w[0:16, _B1_COL:_B1_COL + 1]                 # (16, 1)
    b2 = w[:, _B2_COL:_B2_COL + 1]                    # (32, 1)
    w3 = w[:, _W3_COL:_W3_COL + 1]                    # (32, 1)
    b3 = w[0:1, _B3_COL:_B3_COL + 1]                  # (1, 1)

    # Layer 1: Linear(1, 16) + ReLU.  K=1, so a broadcast FMA on the VPU.
    h1 = jnp.maximum(w1 * x + b1, 0.0)                # (16, TB) f32

    # Layer 2: Linear(16, 32) + ReLU on the MXU.  Explicit bf16 operands give a
    # single MXU pass with f32 accumulation (vs. a multi-pass f32 lowering).
    h2 = jnp.dot(w2.astype(jnp.bfloat16), h1.astype(jnp.bfloat16),
                 preferred_element_type=jnp.float32) + b2
    h2 = jnp.maximum(h2, 0.0)                         # (32, TB) f32

    # Layer 3: Linear(32, 1) — output width 1, so VPU mul + XLU sublane reduce.
    z = jnp.sum(h2 * w3, axis=0, keepdims=True) + b3  # (1, TB)

    # Sigmoid: exp on the EUP, approximate reciprocal also on the EUP (its own
    # VLIW slot), instead of a VPU Newton-Raphson divide.
    e = jnp.exp(-z)
    o_ref[...] = pl.reciprocal(1.0 + e, approx=True).astype(o_ref.dtype)


def _round_up(v, m):
    return ((v + m - 1) // m) * m


def pack_params(params):
    """Pack all six torch-style Linear weights/biases into one (32, 21) f32 slab."""
    slab = jnp.zeros((32, PACK_COLS), jnp.float32)
    slab = slab.at[:, _W2_LO:_W2_HI].set(params["w2"].reshape(32, 16).astype(jnp.float32))
    slab = slab.at[0:16, _W1_COL].set(params["w1"].reshape(16).astype(jnp.float32))
    slab = slab.at[0:16, _B1_COL].set(params["b1"].reshape(16).astype(jnp.float32))
    slab = slab.at[:, _B2_COL].set(params["b2"].reshape(32).astype(jnp.float32))
    slab = slab.at[:, _W3_COL].set(params["w3"].reshape(32).astype(jnp.float32))
    slab = slab.at[0, _B3_COL].set(params["b3"].reshape(()).astype(jnp.float32))
    return slab


def reward_model_forward(x, params, batch_tile=32768):
    """x: (N, 1) float32. params: torch-style Linear weights (out, in), biases (out,)."""
    n = x.shape[0]
    batch_tile = max(128, _round_up(batch_tile, 128))

    # Tile selection: big lane tiles amortize the ~0.35us per-grid-step pipeline
    # overhead; >= 2 grid steps (when the batch allows) keeps both v7x
    # TensorCores busy via the "parallel" grid axis.
    n128 = _round_up(n, 128)
    num_tiles = pl.cdiv(n128, batch_tile)
    if num_tiles == 1 and n128 >= 256:
        num_tiles = 2
    tb = _round_up(pl.cdiv(n128, num_tiles), 128)
    n_pad = tb * num_tiles

    # Lane-dense input (1, n_pad): single pad, no zeros+scatter double HBM pass.
    x_t = x.reshape(1, n).astype(jnp.float32)
    if n_pad != n:
        x_t = jnp.pad(x_t, ((0, 0), (0, n_pad - n)))

    w_slab = pack_params(params)

    # ~2*(1*16 + 16*32 + 32*1) matmul flops + bias/ReLU work per element.
    cost = pl.CostEstimate(
        flops=1280 * n_pad,
        transcendentals=2 * n_pad,            # exp + reciprocal per element
        bytes_accessed=8 * n_pad + int(w_slab.size) * 4,
    )

    out_t = pl.pallas_call(
        reward_mlp_kernel,
        out_shape=jax.ShapeDtypeStruct((1, n_pad), jnp.float32),
        grid=(num_tiles,),
        in_specs=[
            pl.BlockSpec((1, tb), lambda i: (0, i)),          # x tiled over lanes
            pl.BlockSpec((32, PACK_COLS), lambda i: (0, 0)),  # resident packed weights
        ],
        out_specs=pl.BlockSpec((1, tb), lambda i: (0, i)),
        compiler_params=pltpu.CompilerParams(
            dimension_semantics=("parallel",),
            vmem_limit_bytes=32 * 1024 * 1024,
        ),
        cost_estimate=cost,
    )(x_t, w_slab)

    # Back to the module's (N, 1) output layout, dropping padding.
    return out_t[0, :n].reshape(n, 1)


def init_params(key):
    """Deterministic synthetic init matching nn.Linear shapes (weight: (out,in), bias: (out,))."""
    ks = jax.random.split(key, 6)

    def uniform(k, shape, fan_in):
        bound = 1.0 / jnp.sqrt(fan_in)
        return jax.random.uniform(k, shape, jnp.float32, -bound, bound)

    return {
        "w1": uniform(ks[0], (16, 1), 1),
        "b1": uniform(ks[1], (16,), 1),
        "w2": uniform(ks[2], (32, 16), 16),
        "b2": uniform(ks[3], (32,), 16),
        "w3": uniform(ks[4], (1, 32), 32),
        "b3": uniform(ks[5], (1,), 32),
    }


def reference_forward(x, params):
    h1 = jax.nn.relu(x @ params["w1"].T + params["b1"])
    h2 = jax.nn.relu(h1 @ params["w2"].T + params["b2"])
    return jax.nn.sigmoid(h2 @ params["w3"].T + params["b3"])


if __name__ == "__main__":
    key = jax.random.PRNGKey(0)
    k_x, k_p = jax.random.split(key)
    batch = 8
    x = jax.random.normal(k_x, (batch, 1), dtype=jnp.float32)
    params = init_params(k_p)

    out = jax.block_until_ready(reward_model_forward(x, params))

    ref = reference_forward(x, params)
    assert out.shape == (batch, 1), out.shape
    # Tolerance covers the intentional bf16 cast of the layer-2 MXU matmul and
    # the approximate EUP reciprocal in the sigmoid (both ~1e-3-level effects
    # on a [0, 1]-bounded output).
    assert jnp.allclose(out, ref, atol=5e-3, rtol=5e-3), "mismatch vs reference"
    print("KERNEL_OK")
</pallas_src>

<mosaic_0001>
module attributes {stable_mosaic.version = 11 : i64} {
  func.func @reward_mlp_kernel(%arg0: i32, %arg1: memref<1x128xf32, #tpu.memory_space<vmem>>, %arg2: memref<32x21xf32, #tpu.memory_space<vmem>>, %arg3: memref<1x128xf32, #tpu.memory_space<vmem>>) attributes {dimension_semantics = [#tpu.dimension_semantics<parallel>], iteration_bounds = array<i64: 1>, scalar_prefetch = 0 : i64, scratch_operands = 0 : i64, tpu.core_type = #tpu.core_type<tc>, window_params = [{transform_indices = @transform_0, window_bounds = array<i64: 1, 128>}, {pipeline_mode = #tpu.pipeline_mode<synchronous>, transform_indices = @transform_1, window_bounds = array<i64: 32, 21>}, {transform_indices = @transform_2, window_bounds = array<i64: 1, 128>}]} {
    %c0 = arith.constant 0 : index
    %c0_0 = arith.constant 0 : index
    %0 = vector.load %arg1[%c0, %c0_0] : memref<1x128xf32, #tpu.memory_space<vmem>>, vector<1x128xf32>
    %c0_1 = arith.constant 0 : index
    %c0_2 = arith.constant 0 : index
    %1 = vector.load %arg2[%c0_1, %c0_2] : memref<32x21xf32, #tpu.memory_space<vmem>>, vector<32x21xf32>
    %2 = vector.extract_strided_slice %1 {offsets = [0, 0], sizes = [32, 16], strides = [1, 1]} : vector<32x21xf32> to vector<32x16xf32>
    %3 = vector.extract_strided_slice %1 {offsets = [0, 16], sizes = [16, 1], strides = [1, 1]} : vector<32x21xf32> to vector<16x1xf32>
    %4 = vector.extract_strided_slice %1 {offsets = [0, 17], sizes = [16, 1], strides = [1, 1]} : vector<32x21xf32> to vector<16x1xf32>
    %5 = vector.extract_strided_slice %1 {offsets = [0, 18], sizes = [32, 1], strides = [1, 1]} : vector<32x21xf32> to vector<32x1xf32>
    %6 = vector.extract_strided_slice %1 {offsets = [0, 19], sizes = [32, 1], strides = [1, 1]} : vector<32x21xf32> to vector<32x1xf32>
    %7 = vector.extract_strided_slice %1 {offsets = [0, 20], sizes = [1, 1], strides = [1, 1]} : vector<32x21xf32> to vector<1x1xf32>
    %8 = vector.broadcast %3 : vector<16x1xf32> to vector<16x128xf32>
    %9 = vector.broadcast %0 : vector<1x128xf32> to vector<16x128xf32>
    %10 = arith.mulf %8, %9 : vector<16x128xf32>
    %11 = vector.broadcast %4 : vector<16x1xf32> to vector<16x128xf32>
    %12 = arith.addf %10, %11 : vector<16x128xf32>
    %cst = arith.constant 0.000000e+00 : f32
    %13 = vector.broadcast %cst : f32 to vector<16x128xf32>
    %14 = arith.maximumf %12, %13 : vector<16x128xf32>
    %15 = arith.truncf %2 : vector<32x16xf32> to vector<32x16xbf16>
    %16 = arith.truncf %14 : vector<16x128xf32> to vector<16x128xbf16>
    %cst_3 = arith.constant dense<0.000000e+00> : vector<32x128xf32>
    %17 = tpu.matmul %15, %16, %cst_3 {dimension_numbers = #tpu.dot_dimension_numbers<[1], [0], [0], [1], [0, 0, 1, 1], [], []>} : vector<32x16xbf16>, vector<16x128xbf16>, vector<32x128xf32> -> vector<32x128xf32>
    %18 = vector.broadcast %5 : vector<32x1xf32> to vector<32x128xf32>
    %19 = arith.addf %17, %18 : vector<32x128xf32>
    %cst_4 = arith.constant 0.000000e+00 : f32
    %20 = vector.broadcast %cst_4 : f32 to vector<32x128xf32>
    %21 = arith.maximumf %19, %20 : vector<32x128xf32>
    %22 = vector.broadcast %6 : vector<32x1xf32> to vector<32x128xf32>
    %23 = arith.mulf %21, %22 : vector<32x128xf32>
    %cst_5 = arith.constant dense<0.000000e+00> : vector<128xf32>
    %24 = vector.multi_reduction <add>, %23, %cst_5 [0] : vector<32x128xf32> to vector<128xf32>
    %25 = vector.shape_cast %24 : vector<128xf32> to vector<1x128xf32>
    %26 = vector.broadcast %7 : vector<1x1xf32> to vector<1x128xf32>
    %27 = arith.addf %25, %26 : vector<1x128xf32>
    %cst_6 = arith.constant 0.000000e+00 : f32
    %28 = vector.broadcast %cst_6 : f32 to vector<1x128xf32>
    %29 = arith.subf %28, %27 : vector<1x128xf32>
    %30 = math.exp %29 : vector<1x128xf32>
    %cst_7 = arith.constant 1.000000e+00 : f32
    %31 = vector.broadcast %cst_7 : f32 to vector<1x128xf32>
    %32 = arith.addf %31, %30 : vector<1x128xf32>
    %33 = tpu.reciprocal %32 {approx = true} : vector<1x128xf32> -> vector<1x128xf32>
    %c0_8 = arith.constant 0 : index
    %c0_9 = arith.constant 0 : index
    %34 = vector.load %arg3[%c0_8, %c0_9] : memref<1x128xf32, #tpu.memory_space<vmem>>, vector<1x128xf32>
    tpu.vector_store %arg3[%c0_8, %c0_9], %33 {strides = array<i32>} : memref<1x128xf32, #tpu.memory_space<vmem>>, vector<1x128xf32>,
    return
  }
  func.func @transform_0(%arg0: i32) -> (i32, i32) {
    %c0_i32 = arith.constant 0 : i32
    %c0_i32_0 = arith.constant 0 : i32
    return %c0_i32, %arg0 : i32, i32
  }
  func.func @transform_1(%arg0: i32) -> (i32, i32) {
    %c0_i32 = arith.constant 0 : i32
    %c0_i32_0 = arith.constant 0 : i32
    %c0_i32_1 = arith.constant 0 : i32
    return %c0_i32, %c0_i32_0 : i32, i32
  }
  func.func @transform_2(%arg0: i32) -> (i32, i32) {
    %c0_i32 = arith.constant 0 : i32
    %c0_i32_0 = arith.constant 0 : i32
    return %c0_i32, %arg0 : i32, i32
  }
}

</mosaic_0001>

<llo_original>
// kernel: tpu_custom_call.1
$region0: #{tpu_custom_call.1}
  #allocation0 [shape = 'u32[]', space=smem, size = 0x4, offset = 0x4, fixed_abs, tag = 'smem constant byte address 0x4 - core index']
  #allocation1 [shape = 'u32[72,128]{1,0:T(1,128)}', space=vmem, size = 0x9000, scoped, tag = 'internal scratch']
  %s0 = inlined_call_operand.vmem [shape: f32[1,128], index: 0, kind: input, shape index: {}]
  %s1 = inlined_call_operand.vmem [shape: f32[32,21], index: 1, kind: input, shape index: {}]
  %s2 = inlined_call_operand.hbm [shape: f32[1,128], index: 2, kind: output, shape index: {}]
  %s3 = sld [smem:[#allocation0]]
  $region18: #{tpu_custom_call.1} parent=0
    _
  %s5 = ssub.s32 1, %s3
  %s6 = scalar_select 0, %s5, %s3
  $region1: #{tpu_custom_call.1} parent=0
    #allocation2 [shape = 'u8[512]{0}', space=vmem, size = 0x400, scoped, tag = 'output window, operand 0, single buffered']
    #allocation3 [shape = 's32[1]{0}', space=sflag, size = 0x4, scoped, tag = 'scoped memory for tpu_custom_call.1']
    %7 = vsyncpa [#allocation3], 0
    // Predicated region
    $region2: #{tpu_custom_call.1} parent=1 // pred_check
      _
    $region3: #{tpu_custom_call.1} parent=1 // pred_check_branch
      %9 = sbr.rel (0) target = $region5
    $region4: #{tpu_custom_call.1} parent=1 // pred_region
      _
    $region5: #{tpu_custom_call.1} parent=1 // pred_fallthru
      _
    // Predicated region
    $region6: #{tpu_custom_call.1} parent=1 // pred_check
      _
    $region7: #{tpu_custom_call.1} parent=1 // pred_check_branch
      %11 = sbr.rel (0) target = $region9
    $region8: #{tpu_custom_call.1} parent=1 // pred_region
      _
    $region9: #{tpu_custom_call.1} parent=1 // pred_fallthru
      _
    %v13 = vld [vmem:[%s0] sm:$0x1]
    %v14 = vld [vmem:[%s1] sm:$0xff]
    %v15 = vld [vmem:[%s1 + $0x8] sm:$0xff]
    %v16 = vld [vmem:[%s1 + $0x10] sm:$0xff]
    %v17 = vld [vmem:[%s1 + $0x18] sm:$0xff]
    %19 = vset.pattern.permute.xlu0 16
    %20 = vperm.xlu0 %19, %v14
    %v21 = vpop.permute.xlu0 %20
    %24 = vset.pattern.permute.xlu0 16
    %25 = vperm.xlu0 %24, %v15
    %v26 = vpop.permute.xlu0 %25
    %v29 = vperm.slane %v13, 0
    %v31 = vmul.f32 %v21, %v29
    %v32 = vmul.f32 %v26, %v29
    %33 = vset.pattern.permute.xlu0 17
    %34 = vperm.xlu0 %33, %v14
    %v35 = vpop.permute.xlu0 %34
    %37 = vset.pattern.permute.xlu0 17
    %38 = vperm.xlu0 %37, %v15
    %v39 = vpop.permute.xlu0 %38
    %v41 = vadd.f32 %v31, %v35
    %v42 = vadd.f32 %v32, %v39
    %v43 = vmax.f32 %v41, 0.0
    %v44 = vmax.f32 %v42, 0.0
    %v45 = vpack.c.bf16 %v15, %v14
    %v46 = vpack.c.bf16 %v17, %v16
    %v47 = vpack.c.bf16 %v44, %v43
    %48 = vset.pattern.permute.xlu0 18
    %49 = vperm.xlu0 %48, %v14
    %v50 = vpop.permute.xlu0 %49
    %52 = vset.pattern.permute.xlu0 18
    %53 = vperm.xlu0 %52, %v15
    %v54 = vpop.permute.xlu0 %53
    %57 = vset.pattern.permute.xlu0 18
    %58 = vperm.xlu0 %57, %v16
    %v59 = vpop.permute.xlu0 %58
    %62 = vset.pattern.permute.xlu0 18
    %63 = vperm.xlu0 %62, %v17
    %v64 = vpop.permute.xlu0 %63
    %vm66 = vcmask 130048
    %v68 = vsel %vm66, %v45, 0
    %v71 = vsel %vm66, %v46, 0
    %73 = vmatpush.bf16.msra.mxu0 0
    %74 = vmatpush.bf16.msra.mxu0 0
    %75 = vmatpush.bf16.msra.mxu0 0
    %76 = vmatpush.bf16.msra.mxu0 0
    %77 = vmatpush.bf16.msra.mxu0 0
    %78 = vmatpush.bf16.msra.mxu0 0
    %79 = vmatpush.bf16.msra.mxu0 0
    %80 = vmatpush.bf16.msra.mxu0 %v47
    %81 = vmatmul.bf16.gmra.mxu0 %v68
    %v82 = vpop.f32.mrf.mxu0
    %v83 = vadd.f32 %v50, %v82
    %v84 = vpop.f32.mrf.mxu0
    %v85 = vadd.f32 %v54, %v84
    %86 = vmatmul.bf16.gmra.mxu0 %v71
    %v87 = vpop.f32.mrf.mxu0
    %v88 = vadd.f32 %v59, %v87
    %v89 = vpop.f32.mrf.mxu0
    %v90 = vadd.f32 %v64, %v89
    %91 = vdwg.mxu0
    %v92 = vmax.f32 %v83, 0.0
    %v93 = vmax.f32 %v85, 0.0
    %v94 = vmax.f32 %v88, 0.0
    %v95 = vmax.f32 %v90, 0.0
    %96 = vset.pattern.permute.xlu0 19
    %97 = vperm.xlu0 %96, %v14
    %v98 = vpop.permute.xlu0 %97
    %100 = vset.pattern.permute.xlu0 19
    %101 = vperm.xlu0 %100, %v15
    %v102 = vpop.permute.xlu0 %101
    %104 = vset.pattern.permute.xlu0 19
    %105 = vperm.xlu0 %104, %v16
    %v106 = vpop.permute.xlu0 %105
    %108 = vset.pattern.permute.xlu0 19
    %109 = vperm.xlu0 %108, %v17
    %v110 = vpop.permute.xlu0 %109
    %v112 = vmul.f32 %v92, %v98
    %v113 = vmul.f32 %v93, %v102
    %v114 = vmul.f32 %v94, %v106
    %v115 = vmul.f32 %v95, %v110
    %v116 = vadd.f32 %v112, %v113
    %v117 = vadd.f32 %v116, %v114
    %v118 = vadd.f32 %v117, %v115
    %v119 = vrot.slane %v118, 4
    %v120 = vadd.f32 %v118, %v119
    %v121 = vrot.slane %v120, 2
    %v122 = vadd.f32 %v120, %v121
    %v123 = vrot.slane %v122, 1
    %v124 = vadd.f32 %v122, %v123
    %125 = vset.pattern.permute.xlu0 20
    %126 = vperm.xlu0 %125, %v14
    %v127 = vpop.permute.xlu0 %126
    %v129 = vadd.f32 %v124, %v127
    %v130 = vsub.f32 0.0, %v129
    %v131 = vmul.f32 %v130, 1.442695
    %v132 = vpow.pop %v131
    %v133 = vadd.f32 %v132, 1.0
    %v134 = vrcp.pop %v133
    %135 = vst [vmem:[#allocation2] sm:$0x1] %v134
    // Predicated region
    $region10: #{tpu_custom_call.1} parent=1 // pred_check
      _
    $region11: #{tpu_custom_call.1} parent=1 // pred_check_branch
      %137 = sbr.rel (0) target = $region13
    $region12: #{tpu_custom_call.1} parent=1 // pred_region
      %139 = vsyncadd [#allocation3], 0
      %s141 = sshll.u32 [#allocation2], 4
      %s142 = int_to_ptr.vmem [resolvable:$true] %s141
      %s143 = sshll.u32 %s2, 4
      %s144 = int_to_ptr.hbm [resolvable:$true] %s143
      %146 = dma.vmem_to_hbm [thread:$0]  %s142, 16, %s144, [#allocation3]
    $region13: #{tpu_custom_call.1} parent=1 // pred_fallthru
      _
    // Predicated region
    $region14: #{tpu_custom_call.1} parent=1 // pred_check
      _
    $region15: #{tpu_custom_call.1} parent=1 // pred_check_branch
      %148 = sbr.rel (0) target = $region17
    $region16: #{tpu_custom_call.1} parent=1 // pred_region
      %150 = dma.done [#allocation3], 16
    $region17: #{tpu_custom_call.1} parent=1 // pred_fallthru
      _
    %151 = vsyncpa [#allocation3], 1

</llo_original>
